<compile_context>
chip_gen: v7x
topology: tpu7x:2x2x1
jax: 0.10.0
libtpu: 0.0.40
codegen_flags: <defaults>
</compile_context>

<pallas_src>
import functools

import jax
import jax.numpy as jnp
from jax.experimental import pallas as pl
from jax.experimental.pallas import tpu as pltpu


def _cdiv(a, b):
    return (a + b - 1) // b


def _round_up(x, m):
    return _cdiv(x, m) * m


def _balanced_tile(dim, max_tile, align):
    """Uniform tile size that keeps the tile count at its minimum
    (ceil(dim/max_tile)) while minimizing padding waste."""
    padded_min = _round_up(dim, align)
    if padded_min <= max_tile:
        return padded_min
    n_tiles = _cdiv(dim, max_tile)
    return _round_up(_cdiv(dim, n_tiles), align)


def _pad2(a, rows, cols):
    r, c = a.shape
    if r == rows and c == cols:
        return a
    return jnp.pad(a, ((0, rows - r), (0, cols - c)))


def swiglu_kernel(x_ref, wg_ref, wv_ref, bg_ref, bv_ref, o_ref,
                  acc_g_ref, acc_v_ref):
    """One (tm, tn) output tile of silu(x@Wg + bg) * (x@Wv + bv).

    x_ref           : (tm, tk)       activation row-slab, current K slice
    wg_ref / wv_ref : (tk, tn)       gate / value weight blocks
    bg_ref / bv_ref : (1, tn)        gate / value bias slices
    o_ref           : (tm, tn)       output tile
    acc_g / acc_v   : (tm, tn) f32   accumulators, persist across the K axis
    """
    k = pl.program_id(2)

    @pl.when(k == 0)
    def _init():
        # Fold the bias into the accumulator init (no per-K-step bias add).
        acc_g_ref[...] = jnp.broadcast_to(
            bg_ref[...].astype(jnp.float32), acc_g_ref.shape)
        acc_v_ref[...] = jnp.broadcast_to(
            bv_ref[...].astype(jnp.float32), acc_v_ref.shape)

    x = x_ref[...]
    acc_g_ref[...] += jnp.dot(x, wg_ref[...],
                              preferred_element_type=jnp.float32)
    acc_v_ref[...] += jnp.dot(x, wv_ref[...],
                              preferred_element_type=jnp.float32)

    @pl.when(k == pl.num_programs(2) - 1)
    def _finalize():
        gate = acc_g_ref[...]
        value = acc_v_ref[...]
        # SiLU epilogue in f32 (VPU + EUP), cast once on store (lane-dense).
        o_ref[...] = (gate * jax.nn.sigmoid(gate) * value).astype(o_ref.dtype)


@functools.partial(jax.jit, static_argnames=("compute_dtype",))
def swiglu(x, w_gate, b_gate, w_value, b_value, *, compute_dtype=None):
    """x: [B, S, K]; w_*: [K, N]; b_*: [N].  Returns [B, S, N].

    compute_dtype=jnp.bfloat16 opts into a bf16 matmul (f32 accumulation and
    f32 epilogue are kept); default None keeps exact f32 semantics.
    """
    orig_dtype = x.dtype
    B, S, K = x.shape
    N = w_gate.shape[1]
    M = B * S

    mm_dtype = jnp.dtype(compute_dtype) if compute_dtype is not None \
        else jnp.dtype(x.dtype)
    sublane = 16 if mm_dtype.itemsize == 2 else 8

    # Balanced tiles, capped at 512: worst-case f32 VMEM footprint
    # (2x x + 2x Wg + 2x Wv + 2x out + 2 accumulators) ~ 10 MiB, which fits
    # every generation's scoped-VMEM default (16 MiB on v5e, 32 MiB v6e/v7x).
    MAX_TM, MAX_TN, MAX_TK = 512, 512, 512
    tm = _balanced_tile(M, MAX_TM, sublane)
    tn = _balanced_tile(N, MAX_TN, 128)
    tk = _balanced_tile(K, MAX_TK, 128)

    Mp = _round_up(M, tm)
    Np = _round_up(N, tn)
    Kp = _round_up(K, tk)
    nM, nN, nK = Mp // tm, Np // tn, Kp // tk

    # v7x megacore: keep the parallel grid extent >= 2 when it is free to do
    # so (single M tile and a single, splittable N tile).
    if nM == 1 and nN == 1 and tn >= 256 and tn % 256 == 0:
        tn //= 2
        nN = 2

    # Cast (optional bf16 path) then zero-pad to tile granularity; padded
    # rows/cols contribute nothing and are sliced off at the end.  Padding is
    # skipped entirely when shapes are already aligned.
    x2 = x.reshape(M, K)
    wg, wv = w_gate, w_value
    if x2.dtype != mm_dtype:
        x2 = x2.astype(mm_dtype)
    if wg.dtype != mm_dtype:
        wg = wg.astype(mm_dtype)
        wv = wv.astype(mm_dtype)
    x2 = _pad2(x2, Mp, Kp)
    wg = _pad2(wg, Kp, Np)
    wv = _pad2(wv, Kp, Np)
    bg2 = _pad2(b_gate.reshape(1, N), 1, Np)
    bv2 = _pad2(b_value.reshape(1, N), 1, Np)

    mm_bytes = jnp.dtype(mm_dtype).itemsize
    o_bytes = jnp.dtype(orig_dtype).itemsize
    b_bytes = jnp.dtype(bg2.dtype).itemsize
    cost = pl.CostEstimate(
        flops=2 * Mp * Kp * Np * 2 + 4 * Mp * Np,
        transcendentals=Mp * Np,
        bytes_accessed=(nN * Mp * Kp * mm_bytes          # x re-read per N tile
                        + nM * Kp * Np * mm_bytes * 2    # Wg + Wv per M tile
                        + nM * 2 * Np * b_bytes          # biases per M tile
                        + Mp * Np * o_bytes),            # output write
    )

    out_p = pl.pallas_call(
        swiglu_kernel,
        out_shape=jax.ShapeDtypeStruct((Mp, Np), orig_dtype),
        grid_spec=pltpu.PrefetchScalarGridSpec(
            num_scalar_prefetch=0,
            grid=(nM, nN, nK),
            in_specs=[
                pl.BlockSpec((tm, tk), lambda i, j, k: (i, k)),   # x rows
                pl.BlockSpec((tk, tn), lambda i, j, k: (k, j)),   # Wg
                pl.BlockSpec((tk, tn), lambda i, j, k: (k, j)),   # Wv
                pl.BlockSpec((1, tn), lambda i, j, k: (0, j)),    # bg
                pl.BlockSpec((1, tn), lambda i, j, k: (0, j)),    # bv
            ],
            out_specs=pl.BlockSpec((tm, tn), lambda i, j, k: (i, j)),
            scratch_shapes=[pltpu.VMEM((tm, tn), jnp.float32),
                            pltpu.VMEM((tm, tn), jnp.float32)],
        ),
        compiler_params=pltpu.CompilerParams(
            dimension_semantics=("parallel", "parallel", "arbitrary"),
        ),
        cost_estimate=cost,
    )(x2, wg, wv, bg2, bv2)

    return out_p[:M, :N].reshape(B, S, N)


def swiglu_reference(x, w_gate, b_gate, w_value, b_value):
    hi = jax.lax.Precision.HIGHEST
    gate = jnp.einsum("bsk,kn->bsn", x, w_gate, precision=hi) + b_gate
    value = jnp.einsum("bsk,kn->bsn", x, w_value, precision=hi) + b_value
    return jax.nn.silu(gate) * value


if __name__ == "__main__":
    # Small shapes consistent with the module: batch=2, seq=8, in=32, out=32.
    B, S, IN, OUT = 2, 8, 32, 32
    key = jax.random.PRNGKey(0)
    kx, kwg, kbg, kwv, kbv = jax.random.split(key, 5)

    x = jax.random.normal(kx, (B, S, IN), dtype=jnp.float32)

    # Init matching nn.Linear's uniform(-1/sqrt(in), 1/sqrt(in)).
    bound = 1.0 / jnp.sqrt(jnp.float32(IN))
    w_gate = jax.random.uniform(kwg, (IN, OUT), jnp.float32, -bound, bound)
    b_gate = jax.random.uniform(kbg, (OUT,), jnp.float32, -bound, bound)
    w_value = jax.random.uniform(kwv, (IN, OUT), jnp.float32, -bound, bound)
    b_value = jax.random.uniform(kbv, (OUT,), jnp.float32, -bound, bound)

    # f32 path matches the PyTorch reference semantics.
    out = jax.block_until_ready(swiglu(x, w_gate, b_gate, w_value, b_value))
    ref = swiglu_reference(x, w_gate, b_gate, w_value, b_value)
    assert out.shape == (B, S, OUT)
    assert jnp.allclose(out, ref, atol=1e-5, rtol=1e-5), "mismatch vs reference"

    # Ragged shape (batch*seq not tile-aligned) exercises the padding path.
    x_odd = jax.random.normal(kx, (3, 7, IN), dtype=jnp.float32)
    out_odd = jax.block_until_ready(
        swiglu(x_odd, w_gate, b_gate, w_value, b_value))
    ref_odd = swiglu_reference(x_odd, w_gate, b_gate, w_value, b_value)
    assert out_odd.shape == (3, 7, OUT)
    assert jnp.allclose(out_odd, ref_odd, atol=1e-5, rtol=1e-5), "ragged mismatch"

    # Opt-in bf16 matmul path (f32 accumulation): loose tolerance vs f32 ref.
    out_bf = jax.block_until_ready(
        swiglu(x, w_gate, b_gate, w_value, b_value,
               compute_dtype=jnp.bfloat16))
    assert out_bf.shape == (B, S, OUT)
    assert jnp.allclose(out_bf, ref, atol=5e-2, rtol=5e-2), "bf16 path mismatch"

    print("KERNEL_OK")
</pallas_src>

<mosaic_0001>
module attributes {stable_mosaic.version = 11 : i64} {
  func.func @swiglu_kernel(%arg0: i32, %arg1: i32, %arg2: i32, %arg3: memref<16x128xf32, #tpu.memory_space<vmem>>, %arg4: memref<128x128xf32, #tpu.memory_space<vmem>>, %arg5: memref<128x128xf32, #tpu.memory_space<vmem>>, %arg6: memref<1x128xf32, #tpu.memory_space<vmem>>, %arg7: memref<1x128xf32, #tpu.memory_space<vmem>>, %arg8: memref<16x128xf32, #tpu.memory_space<vmem>>, %arg9: memref<16x128xf32, #tpu.memory_space<vmem>>, %arg10: memref<16x128xf32, #tpu.memory_space<vmem>>) attributes {dimension_semantics = [#tpu.dimension_semantics<parallel>, #tpu.dimension_semantics<parallel>, #tpu.dimension_semantics<arbitrary>], iteration_bounds = array<i64: 1, 1, 1>, scalar_prefetch = 0 : i64, scratch_operands = 2 : i64, tpu.core_type = #tpu.core_type<tc>, window_params = [{transform_indices = @transform_0, window_bounds = array<i64: 16, 128>}, {transform_indices = @transform_1, window_bounds = array<i64: 128, 128>}, {transform_indices = @transform_2, window_bounds = array<i64: 128, 128>}, {transform_indices = @transform_3, window_bounds = array<i64: 1, 128>}, {transform_indices = @transform_4, window_bounds = array<i64: 1, 128>}, {transform_indices = @transform_5, window_bounds = array<i64: 16, 128>}]} {
    %c0_i32 = arith.constant 0 : i32
    %0 = arith.cmpi eq, %arg2, %c0_i32 : i32
    %1 = arith.extui %0 : i1 to i32
    %c0_i32_0 = arith.constant 0 : i32
    %2 = arith.cmpi ne, %1, %c0_i32_0 : i32
    scf.if %2 {
      %c0_17 = arith.constant 0 : index
      %c0_18 = arith.constant 0 : index
      %17 = vector.load %arg6[%c0_17, %c0_18] : memref<1x128xf32, #tpu.memory_space<vmem>>, vector<1x128xf32>
      %18 = vector.shape_cast %17 : vector<1x128xf32> to vector<1x128xf32>
      %19 = vector.broadcast %18 : vector<1x128xf32> to vector<16x128xf32>
      %c0_19 = arith.constant 0 : index
      %c0_20 = arith.constant 0 : index
      %20 = vector.load %arg9[%c0_19, %c0_20] : memref<16x128xf32, #tpu.memory_space<vmem>>, vector<16x128xf32>
      tpu.vector_store %arg9[%c0_19, %c0_20], %19 {strides = array<i32>} : memref<16x128xf32, #tpu.memory_space<vmem>>, vector<16x128xf32>,
      %c0_21 = arith.constant 0 : index
      %c0_22 = arith.constant 0 : index
      %21 = vector.load %arg7[%c0_21, %c0_22] : memref<1x128xf32, #tpu.memory_space<vmem>>, vector<1x128xf32>
      %22 = vector.shape_cast %21 : vector<1x128xf32> to vector<1x128xf32>
      %23 = vector.broadcast %22 : vector<1x128xf32> to vector<16x128xf32>
      %c0_23 = arith.constant 0 : index
      %c0_24 = arith.constant 0 : index
      %24 = vector.load %arg10[%c0_23, %c0_24] : memref<16x128xf32, #tpu.memory_space<vmem>>, vector<16x128xf32>
      tpu.vector_store %arg10[%c0_23, %c0_24], %23 {strides = array<i32>} : memref<16x128xf32, #tpu.memory_space<vmem>>, vector<16x128xf32>,
    } else {
    }
    %c0 = arith.constant 0 : index
    %c0_1 = arith.constant 0 : index
    %3 = vector.load %arg3[%c0, %c0_1] : memref<16x128xf32, #tpu.memory_space<vmem>>, vector<16x128xf32>
    %c0_2 = arith.constant 0 : index
    %c0_3 = arith.constant 0 : index
    %4 = vector.load %arg9[%c0_2, %c0_3] : memref<16x128xf32, #tpu.memory_space<vmem>>, vector<16x128xf32>
    %c0_4 = arith.constant 0 : index
    %c0_5 = arith.constant 0 : index
    %5 = vector.load %arg4[%c0_4, %c0_5] : memref<128x128xf32, #tpu.memory_space<vmem>>, vector<128x128xf32>
    %cst = arith.constant dense<0.000000e+00> : vector<16x128xf32>
    %6 = tpu.matmul %3, %5, %cst {dimension_numbers = #tpu.dot_dimension_numbers<[1], [0], [0], [1], [0, 0, 1, 1], [], []>} : vector<16x128xf32>, vector<128x128xf32>, vector<16x128xf32> -> vector<16x128xf32>
    %7 = arith.addf %4, %6 : vector<16x128xf32>
    %c0_6 = arith.constant 0 : index
    %c0_7 = arith.constant 0 : index
    %8 = vector.load %arg9[%c0_6, %c0_7] : memref<16x128xf32, #tpu.memory_space<vmem>>, vector<16x128xf32>
    tpu.vector_store %arg9[%c0_6, %c0_7], %7 {strides = array<i32>} : memref<16x128xf32, #tpu.memory_space<vmem>>, vector<16x128xf32>,
    %c0_8 = arith.constant 0 : index
    %c0_9 = arith.constant 0 : index
    %9 = vector.load %arg10[%c0_8, %c0_9] : memref<16x128xf32, #tpu.memory_space<vmem>>, vector<16x128xf32>
    %c0_10 = arith.constant 0 : index
    %c0_11 = arith.constant 0 : index
    %10 = vector.load %arg5[%c0_10, %c0_11] : memref<128x128xf32, #tpu.memory_space<vmem>>, vector<128x128xf32>
    %cst_12 = arith.constant dense<0.000000e+00> : vector<16x128xf32>
    %11 = tpu.matmul %3, %10, %cst_12 {dimension_numbers = #tpu.dot_dimension_numbers<[1], [0], [0], [1], [0, 0, 1, 1], [], []>} : vector<16x128xf32>, vector<128x128xf32>, vector<16x128xf32> -> vector<16x128xf32>
    %12 = arith.addf %9, %11 : vector<16x128xf32>
    %c0_13 = arith.constant 0 : index
    %c0_14 = arith.constant 0 : index
    %13 = vector.load %arg10[%c0_13, %c0_14] : memref<16x128xf32, #tpu.memory_space<vmem>>, vector<16x128xf32>
    tpu.vector_store %arg10[%c0_13, %c0_14], %12 {strides = array<i32>} : memref<16x128xf32, #tpu.memory_space<vmem>>, vector<16x128xf32>,
    %c0_i32_15 = arith.constant 0 : i32
    %14 = arith.cmpi eq, %arg2, %c0_i32_15 : i32
    %15 = arith.extui %14 : i1 to i32
    %c0_i32_16 = arith.constant 0 : i32
    %16 = arith.cmpi ne, %15, %c0_i32_16 : i32
    scf.if %16 {
      %c0_17 = arith.constant 0 : index
      %c0_18 = arith.constant 0 : index
      %17 = vector.load %arg9[%c0_17, %c0_18] : memref<16x128xf32, #tpu.memory_space<vmem>>, vector<16x128xf32>
      %c0_19 = arith.constant 0 : index
      %c0_20 = arith.constant 0 : index
      %18 = vector.load %arg10[%c0_19, %c0_20] : memref<16x128xf32, #tpu.memory_space<vmem>>, vector<16x128xf32>
      %19 = arith.negf %17 : vector<16x128xf32>
      %20 = math.exp %19 : vector<16x128xf32>
      %cst_21 = arith.constant 1.000000e+00 : f32
      %21 = vector.broadcast %cst_21 : f32 to vector<16x128xf32>
      %22 = arith.addf %21, %20 : vector<16x128xf32>
      %23 = arith.divf %21, %22 : vector<16x128xf32>
      %24 = arith.mulf %17, %23 : vector<16x128xf32>
      %25 = arith.mulf %24, %18 : vector<16x128xf32>
      %c0_22 = arith.constant 0 : index
      %c0_23 = arith.constant 0 : index
      %26 = vector.load %arg8[%c0_22, %c0_23] : memref<16x128xf32, #tpu.memory_space<vmem>>, vector<16x128xf32>
      tpu.vector_store %arg8[%c0_22, %c0_23], %25 {strides = array<i32>} : memref<16x128xf32, #tpu.memory_space<vmem>>, vector<16x128xf32>,
    } else {
    }
    return
  }
  func.func @transform_0(%arg0: i32, %arg1: i32, %arg2: i32) -> (i32, i32) {
    %c0_i32 = arith.constant 0 : i32
    return %arg0, %arg2 : i32, i32
  }
  func.func @transform_1(%arg0: i32, %arg1: i32, %arg2: i32) -> (i32, i32) {
    %c0_i32 = arith.constant 0 : i32
    return %arg2, %arg1 : i32, i32
  }
  func.func @transform_2(%arg0: i32, %arg1: i32, %arg2: i32) -> (i32, i32) {
    %c0_i32 = arith.constant 0 : i32
    return %arg2, %arg1 : i32, i32
  }
  func.func @transform_3(%arg0: i32, %arg1: i32, %arg2: i32) -> (i32, i32) {
    %c0_i32 = arith.constant 0 : i32
    %c0_i32_0 = arith.constant 0 : i32
    return %c0_i32, %arg1 : i32, i32
  }
  func.func @transform_4(%arg0: i32, %arg1: i32, %arg2: i32) -> (i32, i32) {
    %c0_i32 = arith.constant 0 : i32
    %c0_i32_0 = arith.constant 0 : i32
    return %c0_i32, %arg1 : i32, i32
  }
  func.func @transform_5(%arg0: i32, %arg1: i32, %arg2: i32) -> (i32, i32) {
    %c0_i32 = arith.constant 0 : i32
    return %arg0, %arg1 : i32, i32
  }
}

</mosaic_0001>

<llo_original>
// kernel: swiglu.1
$region0: #{swiglu.1}
  #allocation0 [shape = 'u32[]', space=smem, size = 0x4, offset = 0x4, fixed_abs, tag = 'smem constant byte address 0x4 - core index']
  #allocation1 [shape = 'u32[144,128]{1,0:T(1,128)}', space=vmem, size = 0x12000, scoped, tag = 'internal scratch']
  #allocation2 [shape = 'f32[16,128]{1,0:T(8,128)}', space=vmem, size = 0x2000, scoped, tag = 'scratch operand']
  #allocation3 [shape = 'f32[16,128]{1,0:T(8,128)}', space=vmem, size = 0x2000, scoped, tag = 'scratch operand']
  %s0 = inlined_call_operand.vmem [shape: f32[16,128], index: 0, kind: input, shape index: {}]
  %s1 = inlined_call_operand.vmem [shape: f32[128,128], index: 1, kind: input, shape index: {}]
  %s2 = inlined_call_operand.vmem [shape: f32[128,128], index: 2, kind: input, shape index: {}]
  %s3 = inlined_call_operand.vmem [shape: f32[1,128], index: 3, kind: input, shape index: {}]
  %s4 = inlined_call_operand.vmem [shape: f32[1,128], index: 4, kind: input, shape index: {}]
  %s5 = inlined_call_operand.vmem [shape: f32[16,128], index: 5, kind: output, shape index: {}]
  %s6 = sld [smem:[#allocation0]]
  $region38: #{swiglu.1} parent=0
    _
  %s8 = ssub.s32 1, %s6
  %s9 = scalar_select 0, %s8, %s6
  // Predicated region
  $region2: #{swiglu.1} parent=0 // pred_check
    _
  $region3: #{swiglu.1} parent=0 // pred_check_branch
    %11 = sbr.rel (0) target = $region5
  $region4: #{swiglu.1} parent=0 // pred_region
    _
  $region5: #{swiglu.1} parent=0 // pred_fallthru
    _
  // Predicated region
  $region6: #{swiglu.1} parent=0 // pred_check
    _
  $region7: #{swiglu.1} parent=0 // pred_check_branch
    %13 = sbr.rel (0) target = $region9
  $region8: #{swiglu.1} parent=0 // pred_region
    _
  $region9: #{swiglu.1} parent=0 // pred_fallthru
    _
  // Predicated region
  $region10: #{swiglu.1} parent=0 // pred_check
    _
  $region11: #{swiglu.1} parent=0 // pred_check_branch
    %15 = sbr.rel (0) target = $region13
  $region12: #{swiglu.1} parent=0 // pred_region
    _
  $region13: #{swiglu.1} parent=0 // pred_fallthru
    _
  // Predicated region
  $region14: #{swiglu.1} parent=0 // pred_check
    _
  $region15: #{swiglu.1} parent=0 // pred_check_branch
    %17 = sbr.rel (0) target = $region17
  $region16: #{swiglu.1} parent=0 // pred_region
    _
  $region17: #{swiglu.1} parent=0 // pred_fallthru
    _
  // Predicated region
  $region18: #{swiglu.1} parent=0 // pred_check
    _
  $region19: #{swiglu.1} parent=0 // pred_check_branch
    %19 = sbr.rel (0) target = $region21
  $region20: #{swiglu.1} parent=0 // pred_region
    _
  $region21: #{swiglu.1} parent=0 // pred_fallthru
    _
  %p20 = scmp.eq.s32.totalorder 0, 0
  // Predicated region
  $region22: #{swiglu.1} parent=0 // pred_check
    %p21 = pneg %p20
  $region23: #{swiglu.1} parent=0 // pred_check_branch
    %23 = sbr.rel (%p21) target = $region25
  $region24: #{swiglu.1} parent=0 // pred_region
    %v24 = vld [vmem:[%s3] sm:$0x1]
    %v26 = vlaneseq
    %v27 = vshrl.u32 %v26, 7
    %v28 = vsub.s32 0, %v27
    %v29 = vrot.slane %v24, %v28
    %31 = vst [vmem:[#allocation2] sm:$0xff] %v29
    %32 = vst [vmem:[#allocation2 + $0x8] sm:$0xff] %v29
    %v33 = vld [vmem:[%s4] sm:$0x1]
    %v35 = vlaneseq
    %v36 = vshrl.u32 %v35, 7
    %v37 = vsub.s32 0, %v36
    %v38 = vrot.slane %v33, %v37
    %40 = vst [vmem:[#allocation3] sm:$0xff] %v38
    %41 = vst [vmem:[#allocation3 + $0x8] sm:$0xff] %v38
  $region25: #{swiglu.1} parent=0 // pred_fallthru
    _
  %v42 = vld [vmem:[%s0] sm:$0xff]
  %v43 = vld [vmem:[%s0 + $0x8] sm:$0xff]
  %v44 = vld [vmem:[#allocation2] sm:$0xff]
  %v45 = vld [vmem:[#allocation2 + $0x8] sm:$0xff]
  %v46 = vld [vmem:[%s1] sm:$0xff]
  %v47 = vld [vmem:[%s1 + $0x8] sm:$0xff]
  %v48 = vld [vmem:[%s1 + $0x10] sm:$0xff]
  %v49 = vld [vmem:[%s1 + $0x18] sm:$0xff]
  %v50 = vld [vmem:[%s1 + $0x20] sm:$0xff]
  %v51 = vld [vmem:[%s1 + $0x28] sm:$0xff]
  %v52 = vld [vmem:[%s1 + $0x30] sm:$0xff]
  %v53 = vld [vmem:[%s1 + $0x38] sm:$0xff]
  %v54 = vld [vmem:[%s1 + $0x40] sm:$0xff]
  %v55 = vld [vmem:[%s1 + $0x48] sm:$0xff]
  %v56 = vld [vmem:[%s1 + $0x50] sm:$0xff]
  %v57 = vld [vmem:[%s1 + $0x58] sm:$0xff]
  %v58 = vld [vmem:[%s1 + $0x60] sm:$0xff]
  %v59 = vld [vmem:[%s1 + $0x68] sm:$0xff]
  %v60 = vld [vmem:[%s1 + $0x70] sm:$0xff]
  %v61 = vld [vmem:[%s1 + $0x78] sm:$0xff]
  %62 = vmatprep.subr.mxu0 0.0
  %63 = vmatpush1.msra.mxu0 %v46
  %64 = vmatprep.subr.mxu0 0.0
  %65 = vmatpush1.msra.mxu0 %v47
  %66 = vmatprep.subr.mxu0 0.0
  %67 = vmatpush1.msra.mxu0 %v48
  %68 = vmatprep.subr.mxu0 0.0
  %69 = vmatpush1.msra.mxu0 %v49
  %70 = vmatprep.subr.mxu0 0.0
  %71 = vmatpush1.msra.mxu0 %v50
  %72 = vmatprep.subr.mxu0 0.0
  %73 = vmatpush1.msra.mxu0 %v51
  %74 = vmatprep.subr.mxu0 0.0
  %75 = vmatpush1.msra.mxu0 %v52
  %76 = vmatprep.subr.mxu0 0.0
  %77 = vmatpush1.msra.mxu0 %v53
  %78 = vmatprep.subr.mxu0 0.0
  %79 = vmatpush1.msra.mxu0 %v54
  %80 = vmatprep.subr.mxu0 0.0
  %81 = vmatpush1.msra.mxu0 %v55
  %82 = vmatprep.subr.mxu0 0.0
  %83 = vmatpush1.msra.mxu0 %v56
  %84 = vmatprep.subr.mxu0 0.0
  %85 = vmatpush1.msra.mxu0 %v57
  %86 = vmatprep.subr.mxu0 0.0
  %87 = vmatpush1.msra.mxu0 %v58
  %88 = vmatprep.subr.mxu0 0.0
  %89 = vmatpush1.msra.mxu0 %v59
  %90 = vmatprep.subr.mxu0 0.0
  %91 = vmatpush1.msra.mxu0 %v60
  %92 = vmatprep.subr.mxu0 0.0
  %93 = vmatpush1.msra.mxu0 %v61
  %94 = vmatprep.subr.mxu0 0.0
  %95 = vmatpush1.msra.mxu0 0.0
  %96 = vmatprep.subr.mxu0 0.0
  %97 = vmatpush1.msra.mxu0 0.0
  %98 = vmatprep.subr.mxu0 0.0
  %99 = vmatpush1.msra.mxu0 0.0
  %100 = vmatprep.subr.mxu0 0.0
  %101 = vmatpush1.msra.mxu0 0.0
  %102 = vmatprep.subr.mxu0 0.0
  %103 = vmatpush1.msra.mxu0 0.0
  %104 = vmatprep.subr.mxu0 0.0
  %105 = vmatpush1.msra.mxu0 0.0
  %106 = vmatprep.subr.mxu0 0.0
  %107 = vmatpush1.msra.mxu0 0.0
  %108 = vmatprep.subr.mxu0 0.0
  %109 = vmatpush1.msra.mxu0 0.0
  %110 = vmatprep.subr.mxu0 0.0
  %111 = vmatpush1.msra.mxu0 0.0
  %112 = vmatprep.subr.mxu0 0.0
  %113 = vmatpush1.msra.mxu0 0.0
  %114 = vmatprep.subr.mxu0 0.0
  %115 = vmatpush1.msra.mxu0 0.0
  %116 = vmatprep.subr.mxu0 0.0
  %117 = vmatpush1.msra.mxu0 0.0
  %118 = vmatprep.subr.mxu0 0.0
  %119 = vmatpush1.msra.mxu0 0.0
  %120 = vmatprep.subr.mxu0 0.0
  %121 = vmatpush1.msra.mxu0 0.0
  %122 = vmatprep.subr.mxu0 0.0
  %123 = vmatpush1.msra.mxu0 0.0
  %124 = vmatprep.subr.mxu0 0.0
  %125 = vmatpush1.msra.mxu0 0.0
  %126 = vmatprep.mubr.f32.mxu0 0.0
  %127 = vmatmul.mubr.f32.gmra.mrb[0].mxu0 %v42
  %v128 = vpop.f32.mrb[0].mxu0
  %v129 = vadd.f32 0.0, %v128
  %v130 = vpop.f32.mrb[0].mxu0
  %131 = vmatprep.mubr.f32.mxu0 0.0
  %132 = vmatmul.mubr.f32.gmra.mrb[0].mxu0 %v43
  %v133 = vpop.f32.mrb[0].mxu0
  %v134 = vadd.f32 0.0, %v133
  %v135 = vpop.f32.mrb[0].mxu0
  %136 = vdwg.mxu0
  %v137 = vadd.f32 %v44, %v129
  %v138 = vadd.f32 %v45, %v134
  %139 = vst [vmem:[#allocation2] sm:$0xff] %v137
  %140 = vst [vmem:[#allocation2 + $0x8] sm:$0xff] %v138
  %v141 = vld [vmem:[#allocation3] sm:$0xff]
  %v142 = vld [vmem:[#allocation3 + $0x8] sm:$0xff]
  %v143 = vld [vmem:[%s2] sm:$0xff]
  %v144 = vld [vmem:[%s2 + $0x8] sm:$0xff]
  %v145 = vld [vmem:[%s2 + $0x10] sm:$0xff]
  %v146 = vld [vmem:[%s2 + $0x18] sm:$0xff]
  %v147 = vld [vmem:[%s2 + $0x20] sm:$0xff]
  %v148 = vld [vmem:[%s2 + $0x28] sm:$0xff]
  %v149 = vld [vmem:[%s2 + $0x30] sm:$0xff]
  %v150 = vld [vmem:[%s2 + $0x38] sm:$0xff]
  %v151 = vld [vmem:[%s2 + $0x40] sm:$0xff]
  %v152 = vld [vmem:[%s2 + $0x48] sm:$0xff]
  %v153 = vld [vmem:[%s2 + $0x50] sm:$0xff]
  %v154 = vld [vmem:[%s2 + $0x58] sm:$0xff]
  %v155 = vld [vmem:[%s2 + $0x60] sm:$0xff]
  %v156 = vld [vmem:[%s2 + $0x68] sm:$0xff]
  %v157 = vld [vmem:[%s2 + $0x70] sm:$0xff]
  %v158 = vld [vmem:[%s2 + $0x78] sm:$0xff]
  %159 = vmatprep.subr.mxu0 0.0
  %160 = vmatpush1.msra.mxu0 %v143
  %161 = vmatprep.subr.mxu0 0.0
  %162 = vmatpush1.msra.mxu0 %v144
  %163 = vmatprep.subr.mxu0 0.0
  %164 = vmatpush1.msra.mxu0 %v145
  %165 = vmatprep.subr.mxu0 0.0
  %166 = vmatpush1.msra.mxu0 %v146
  %167 = vmatprep.subr.mxu0 0.0
  %168 = vmatpush1.msra.mxu0 %v147
  %169 = vmatprep.subr.mxu0 0.0
  %170 = vmatpush1.msra.mxu0 %v148
  %171 = vmatprep.subr.mxu0 0.0
  %172 = vmatpush1.msra.mxu0 %v149
  %173 = vmatprep.subr.mxu0 0.0
  %174 = vmatpush1.msra.mxu0 %v150
  %175 = vmatprep.subr.mxu0 0.0
  %176 = vmatpush1.msra.mxu0 %v151
  %177 = vmatprep.subr.mxu0 0.0
  %178 = vmatpush1.msra.mxu0 %v152
  %179 = vmatprep.subr.mxu0 0.0
  %180 = vmatpush1.msra.mxu0 %v153
  %181 = vmatprep.subr.mxu0 0.0
  %182 = vmatpush1.msra.mxu0 %v154
  %183 = vmatprep.subr.mxu0 0.0
  %184 = vmatpush1.msra.mxu0 %v155
  %185 = vmatprep.subr.mxu0 0.0
  %186 = vmatpush1.msra.mxu0 %v156
  %187 = vmatprep.subr.mxu0 0.0
  %188 = vmatpush1.msra.mxu0 %v157
  %189 = vmatprep.subr.mxu0 0.0
  %190 = vmatpush1.msra.mxu0 %v158
  %191 = vmatprep.subr.mxu0 0.0
  %192 = vmatpush1.msra.mxu0 0.0
  %193 = vmatprep.subr.mxu0 0.0
  %194 = vmatpush1.msra.mxu0 0.0
  %195 = vmatprep.subr.mxu0 0.0
  %196 = vmatpush1.msra.mxu0 0.0
  %197 = vmatprep.subr.mxu0 0.0
  %198 = vmatpush1.msra.mxu0 0.0
  %199 = vmatprep.subr.mxu0 0.0
  %200 = vmatpush1.msra.mxu0 0.0
  %201 = vmatprep.subr.mxu0 0.0
  %202 = vmatpush1.msra.mxu0 0.0
  %203 = vmatprep.subr.mxu0 0.0
  %204 = vmatpush1.msra.mxu0 0.0
  %205 = vmatprep.subr.mxu0 0.0
  %206 = vmatpush1.msra.mxu0 0.0
  %207 = vmatprep.subr.mxu0 0.0
  %208 = vmatpush1.msra.mxu0 0.0
  %209 = vmatprep.subr.mxu0 0.0
  %210 = vmatpush1.msra.mxu0 0.0
  %211 = vmatprep.subr.mxu0 0.0
  %212 = vmatpush1.msra.mxu0 0.0
  %213 = vmatprep.subr.mxu0 0.0
  %214 = vmatpush1.msra.mxu0 0.0
  %215 = vmatprep.subr.mxu0 0.0
  %216 = vmatpush1.msra.mxu0 0.0
  %217 = vmatprep.subr.mxu0 0.0
  %218 = vmatpush1.msra.mxu0 0.0
  %219 = vmatprep.subr.mxu0 0.0
  %220 = vmatpush1.msra.mxu0 0.0
  %221 = vmatprep.subr.mxu0 0.0
  %222 = vmatpush1.msra.mxu0 0.0
  %223 = vmatprep.mubr.f32.mxu0 0.0
  %224 = vmatmul.mubr.f32.gmra.mrb[0].mxu0 %v42
  %v225 = vpop.f32.mrb[0].mxu0
  %v226 = vadd.f32 0.0, %v225
  %v227 = vpop.f32.mrb[0].mxu0
  %228 = vmatprep.mubr.f32.mxu0 0.0
  %229 = vmatmul.mubr.f32.gmra.mrb[0].mxu0 %v43
  %v230 = vpop.f32.mrb[0].mxu0
  %v231 = vadd.f32 0.0, %v230
  %v232 = vpop.f32.mrb[0].mxu0
  %233 = vdwg.mxu0
  %v234 = vadd.f32 %v141, %v226
  %v235 = vadd.f32 %v142, %v231
  %236 = vst [vmem:[#allocation3] sm:$0xff] %v234
  %237 = vst [vmem:[#allocation3 + $0x8] sm:$0xff] %v235
  // Predicated region
  $region26: #{swiglu.1} parent=0 // pred_check
    %p238 = pneg %p20
  $region27: #{swiglu.1} parent=0 // pred_check_branch
    %240 = sbr.rel (%p238) target = $region29
  $region28: #{swiglu.1} parent=0 // pred_region
    %v241 = vld [vmem:[#allocation2] sm:$0xff]
    %v242 = vld [vmem:[#allocation2 + $0x8] sm:$0xff]
    %v243 = vld [vmem:[#allocation3] sm:$0xff]
    %v244 = vld [vmem:[#allocation3 + $0x8] sm:$0xff]
    %v245 = vxor.u32 %v241, 2147483648
    %v246 = vxor.u32 %v242, 2147483648
    %v247 = vmul.f32 %v245, 1.442695
    %v248 = vpow.pop %v247
    %v249 = vmul.f32 %v246, 1.442695
    %v250 = vpow.pop %v249
    %v251 = vadd.f32 %v248, 1.0
    %v252 = vadd.f32 %v250, 1.0
    %v253 = vrcp.pop %v251
    %v254 = vmul.f32 1.0, %v253
    %v255 = vrcp.pop %v252
    %v256 = vmul.f32 1.0, %v255
    %v257 = vmul.f32 %v241, %v254
    %v258 = vmul.f32 %v242, %v256
    %v259 = vmul.f32 %v257, %v243
    %v260 = vmul.f32 %v258, %v244
    %261 = vst [vmem:[%s5] sm:$0xff] %v259
    %262 = vst [vmem:[%s5 + $0x8] sm:$0xff] %v260
  $region29: #{swiglu.1} parent=0 // pred_fallthru
    _
  // Predicated region
  $region30: #{swiglu.1} parent=0 // pred_check
    _
  $region31: #{swiglu.1} parent=0 // pred_check_branch
    %264 = sbr.rel (0) target = $region33
  $region32: #{swiglu.1} parent=0 // pred_region
    _
  $region33: #{swiglu.1} parent=0 // pred_fallthru
    _
  // Predicated region
  $region34: #{swiglu.1} parent=0 // pred_check
    _
  $region35: #{swiglu.1} parent=0 // pred_check_branch
    %266 = sbr.rel (0) target = $region37
  $region36: #{swiglu.1} parent=0 // pred_region
    _
  $region37: #{swiglu.1} parent=0 // pred_fallthru
    _

</llo_original>
